<compile_context>
chip_gen: v5e
topology: v5e:2x2
jax: 0.10.0
libtpu: 0.0.40
codegen_flags: <defaults>
</compile_context>

<pallas_src>
import jax
import jax.numpy as jnp
from jax import lax
from jax.experimental import pallas as pl
from jax.experimental.pallas import tpu as pltpu

HIDDEN = 64        # logical hidden size (matches nn.LSTM(hidden_size=64))
HP = 128           # lane-padded hidden size
SUBLANE = 8        # sublane minimum for batch padding


def lstm_kernel(xproj_ref, whh_ref, wout_ref, bout_ref, out_ref):
    """Full LSTM recurrence + linear head, fully resident in VMEM.

    xproj_ref : (T, B_pad, 4*HP) f32   x_t @ W_ih^T + (b_ih + b_hh), gate-blocked, padded
    whh_ref   : (HP, 4*HP)      bf16   W_hh^T, per-gate blocks at 128-lane offsets, zero-padded
    wout_ref  : (1, HP)         f32    output head weights (row), zero-padded
    bout_ref  : (1, 1)          f32    output head bias
    out_ref   : (B_pad, 1)      f32    prediction from the last time step
    """
    T = xproj_ref.shape[0]
    BP = xproj_ref.shape[1]

    h0 = jnp.zeros((BP, HP), jnp.float32)
    c0 = jnp.zeros((BP, HP), jnp.float32)

    def step(t, carry):
        h, c = carry
        # bf16 x bf16 -> f32 MXU matmul.  W_hh is (re-)read from VMEM here on
        # purpose: keeping it live across the unrolled loop would consume the
        # whole register file and force spills of the serial h/c/gates chain.
        gates = xproj_ref[t] + jnp.dot(
            h.astype(jnp.bfloat16), whh_ref[...],
            preferred_element_type=jnp.float32)

        # PyTorch gate order: i, f, g, o.  Each slice is an exact 128-lane block.
        # sigmoid(x) = 0.5 + 0.5*tanh(0.5*x): one EUP push per gate.
        i_g = 0.5 + 0.5 * jnp.tanh(0.5 * gates[:, 0 * HP:1 * HP])
        f_g = 0.5 + 0.5 * jnp.tanh(0.5 * gates[:, 1 * HP:2 * HP])
        g_g = jnp.tanh(gates[:, 2 * HP:3 * HP])
        o_g = 0.5 + 0.5 * jnp.tanh(0.5 * gates[:, 3 * HP:4 * HP])

        c_new = f_g * c + i_g * g_g
        h_new = o_g * jnp.tanh(c_new)
        return (h_new, c_new)

    # Unroll short sequences (removes loop overhead only; the recurrence is a
    # strict latency chain).
    h, _ = lax.fori_loop(0, T, step, (h0, c0),
                         unroll=True if T <= 16 else 8)

    # Head: Linear(64 -> 1) as a VPU multiply + lane reduction.
    out = jnp.sum(h * wout_ref[...], axis=-1, keepdims=True) + bout_ref[...]
    out_ref[...] = out.astype(out_ref.dtype)


def pack_params(params):
    """One-time weight packing (pad/transpose/bias-sum), NOT per forward call."""
    H = HIDDEN
    # Input projection row and summed bias, per-gate padded H -> HP.
    wih_row = params["w_ih"][:, 0].reshape(4, H)            # (4, H)
    wih_row = jnp.pad(wih_row, ((0, 0), (0, HP - H))).reshape(4 * HP)
    bias = (params["b_ih"] + params["b_hh"]).reshape(4, H)
    bias = jnp.pad(bias, ((0, 0), (0, HP - H))).reshape(4 * HP)

    # W_hh^T padded to (HP, 4*HP), per-gate blocks at 128-lane boundaries, bf16.
    whh_t = params["w_hh"].T.reshape(H, 4, H)                # (H, 4, H)
    whh_t = jnp.pad(whh_t, ((0, HP - H), (0, 0), (0, HP - H)))
    whh_t = whh_t.reshape(HP, 4 * HP).astype(jnp.bfloat16)

    # Output head, zero-padded row + scalar bias.
    wout_row = jnp.pad(params["w_out"], ((0, 0), (0, HP - H)))   # (1, HP)
    bout = params["b_out"].reshape(1, 1)

    return {"wih_row": wih_row, "bias_row": bias, "whh_t": whh_t,
            "wout_row": wout_row, "bout": bout}


def lstm_forward(x_btI, packed):
    """x_btI: (B, T, 1) batch-first, matching the PyTorch module."""
    B, T, I = x_btI.shape
    assert I == 1
    BP = max(SUBLANE, ((B + SUBLANE - 1) // SUBLANE) * SUBLANE)

    # Hoisted input projection, built directly time-major: (T, BP, 4*HP).
    x_tb = x_btI[..., 0].T                                    # (T, B)
    xproj = (x_tb[:, :, None] * packed["wih_row"][None, None, :]
             + packed["bias_row"][None, None, :])             # (T, B, 4*HP)
    xproj = jnp.pad(xproj, ((0, 0), (0, BP - B), (0, 0)))     # pad batch

    vmem = pl.BlockSpec(memory_space=pltpu.MemorySpace.VMEM)

    out_pad = pl.pallas_call(
        lstm_kernel,
        out_shape=jax.ShapeDtypeStruct((BP, 1), jnp.float32),
        in_specs=[vmem, vmem, vmem, vmem],
        out_specs=vmem,
    )(xproj, packed["whh_t"], packed["wout_row"], packed["bout"])

    return out_pad[:B]


def init_params(key):
    """Deterministic init mimicking PyTorch's U(-1/sqrt(H), 1/sqrt(H))."""
    H = HIDDEN
    k = 1.0 / jnp.sqrt(jnp.float32(H))
    keys = jax.random.split(key, 6)
    u = lambda kk, shape: jax.random.uniform(kk, shape, jnp.float32, -k, k)
    return {
        "w_ih": u(keys[0], (4 * H, 1)),
        "w_hh": u(keys[1], (4 * H, H)),
        "b_ih": u(keys[2], (4 * H,)),
        "b_hh": u(keys[3], (4 * H,)),
        "w_out": u(keys[4], (1, H)),
        "b_out": u(keys[5], (1,)),
    }


def lstm_reference(x_btI, params):
    """Pure-JAX f32 reference (HIGHEST matmul precision) of the same forward."""
    H = HIDDEN
    B, T, _ = x_btI.shape
    h = jnp.zeros((B, H), jnp.float32)
    c = jnp.zeros((B, H), jnp.float32)
    hi = lax.Precision.HIGHEST
    for t in range(T):
        x_t = x_btI[:, t, :]
        gates = (jnp.dot(x_t, params["w_ih"].T, precision=hi) + params["b_ih"]
                 + jnp.dot(h, params["w_hh"].T, precision=hi) + params["b_hh"])
        i_g = jax.nn.sigmoid(gates[:, 0 * H:1 * H])
        f_g = jax.nn.sigmoid(gates[:, 1 * H:2 * H])
        g_g = jnp.tanh(gates[:, 2 * H:3 * H])
        o_g = jax.nn.sigmoid(gates[:, 3 * H:4 * H])
        c = f_g * c + i_g * g_g
        h = o_g * jnp.tanh(c)
    return jnp.dot(h, params["w_out"].T, precision=hi) + params["b_out"]


if __name__ == "__main__":
    key = jax.random.PRNGKey(0)
    pkey, xkey = jax.random.split(key)
    params = init_params(pkey)
    packed = pack_params(params)          # one-time weight packing

    B, T = 2, 8
    x = jax.random.normal(xkey, (B, T, 1), jnp.float32)

    out = lstm_forward(x, packed)
    out = jax.block_until_ready(out)

    ref = lstm_reference(x, params)
    assert out.shape == (B, 1)
    # bf16 MXU operands (vs the f32 reference) accumulate ~1e-3 error over the
    # 8-step recurrence; tolerance loosened accordingly.
    assert jnp.allclose(out, ref, atol=2e-2, rtol=2e-2), (
        f"max abs diff {jnp.max(jnp.abs(out - ref))}")

    print("KERNEL_OK")
</pallas_src>

<mosaic_0001>
module attributes {stable_mosaic.version = 11 : i64} {
  func.func @lstm_kernel(%arg0: memref<8x8x512xf32, #tpu.memory_space<vmem>>, %arg1: memref<128x512xbf16, #tpu.memory_space<vmem>>, %arg2: memref<1x128xf32, #tpu.memory_space<vmem>>, %arg3: memref<1x1xf32, #tpu.memory_space<vmem>>, %arg4: memref<8x1xf32, #tpu.memory_space<vmem>>) attributes {dimension_semantics = [], scalar_prefetch = 0 : i64, scratch_operands = 0 : i64, tpu.core_type = #tpu.core_type<tc>} {
    %cst = arith.constant 0.000000e+00 : f32
    %0 = vector.broadcast %cst : f32 to vector<8x128xf32>
    %cst_0 = arith.constant 0.000000e+00 : f32
    %1 = vector.broadcast %cst_0 : f32 to vector<8x128xf32>
    %c0_i32 = arith.constant 0 : i32
    %2 = arith.index_cast %c0_i32 : i32 to index
    %c0 = arith.constant 0 : index
    %c0_1 = arith.constant 0 : index
    %3 = vector.load %arg0[%2, %c0, %c0_1] : memref<8x8x512xf32, #tpu.memory_space<vmem>>, vector<1x8x512xf32>
    %4 = vector.shape_cast %3 : vector<1x8x512xf32> to vector<8x512xf32>
    %5 = arith.truncf %0 : vector<8x128xf32> to vector<8x128xbf16>
    %c0_2 = arith.constant 0 : index
    %c0_3 = arith.constant 0 : index
    %6 = vector.load %arg1[%c0_2, %c0_3] : memref<128x512xbf16, #tpu.memory_space<vmem>>, vector<128x512xbf16>
    %cst_4 = arith.constant dense<0.000000e+00> : vector<8x512xf32>
    %7 = tpu.matmul %5, %6, %cst_4 {dimension_numbers = #tpu.dot_dimension_numbers<[1], [0], [0], [1], [0, 0, 1, 1], [], []>} : vector<8x128xbf16>, vector<128x512xbf16>, vector<8x512xf32> -> vector<8x512xf32>
    %8 = arith.addf %4, %7 : vector<8x512xf32>
    %9 = vector.extract_strided_slice %8 {offsets = [0, 0], sizes = [8, 128], strides = [1, 1]} : vector<8x512xf32> to vector<8x128xf32>
    %cst_5 = arith.constant 5.000000e-01 : f32
    %10 = vector.broadcast %cst_5 : f32 to vector<8x128xf32>
    %11 = arith.mulf %10, %9 : vector<8x128xf32>
    %12 = math.tanh %11 : vector<8x128xf32>
    %cst_6 = arith.constant 5.000000e-01 : f32
    %13 = vector.broadcast %cst_6 : f32 to vector<8x128xf32>
    %14 = arith.mulf %13, %12 : vector<8x128xf32>
    %cst_7 = arith.constant 5.000000e-01 : f32
    %15 = vector.broadcast %cst_7 : f32 to vector<8x128xf32>
    %16 = arith.addf %15, %14 : vector<8x128xf32>
    %17 = vector.extract_strided_slice %8 {offsets = [0, 128], sizes = [8, 128], strides = [1, 1]} : vector<8x512xf32> to vector<8x128xf32>
    %cst_8 = arith.constant 5.000000e-01 : f32
    %18 = vector.broadcast %cst_8 : f32 to vector<8x128xf32>
    %19 = arith.mulf %18, %17 : vector<8x128xf32>
    %20 = math.tanh %19 : vector<8x128xf32>
    %cst_9 = arith.constant 5.000000e-01 : f32
    %21 = vector.broadcast %cst_9 : f32 to vector<8x128xf32>
    %22 = arith.mulf %21, %20 : vector<8x128xf32>
    %cst_10 = arith.constant 5.000000e-01 : f32
    %23 = vector.broadcast %cst_10 : f32 to vector<8x128xf32>
    %24 = arith.addf %23, %22 : vector<8x128xf32>
    %25 = vector.extract_strided_slice %8 {offsets = [0, 256], sizes = [8, 128], strides = [1, 1]} : vector<8x512xf32> to vector<8x128xf32>
    %26 = math.tanh %25 : vector<8x128xf32>
    %27 = vector.extract_strided_slice %8 {offsets = [0, 384], sizes = [8, 128], strides = [1, 1]} : vector<8x512xf32> to vector<8x128xf32>
    %cst_11 = arith.constant 5.000000e-01 : f32
    %28 = vector.broadcast %cst_11 : f32 to vector<8x128xf32>
    %29 = arith.mulf %28, %27 : vector<8x128xf32>
    %30 = math.tanh %29 : vector<8x128xf32>
    %cst_12 = arith.constant 5.000000e-01 : f32
    %31 = vector.broadcast %cst_12 : f32 to vector<8x128xf32>
    %32 = arith.mulf %31, %30 : vector<8x128xf32>
    %cst_13 = arith.constant 5.000000e-01 : f32
    %33 = vector.broadcast %cst_13 : f32 to vector<8x128xf32>
    %34 = arith.addf %33, %32 : vector<8x128xf32>
    %35 = arith.mulf %24, %1 : vector<8x128xf32>
    %36 = arith.mulf %16, %26 : vector<8x128xf32>
    %37 = arith.addf %35, %36 : vector<8x128xf32>
    %38 = math.tanh %37 : vector<8x128xf32>
    %39 = arith.mulf %34, %38 : vector<8x128xf32>
    %c1_i32 = arith.constant 1 : i32
    %40 = arith.index_cast %c1_i32 : i32 to index
    %c0_14 = arith.constant 0 : index
    %c0_15 = arith.constant 0 : index
    %41 = vector.load %arg0[%40, %c0_14, %c0_15] : memref<8x8x512xf32, #tpu.memory_space<vmem>>, vector<1x8x512xf32>
    %42 = vector.shape_cast %41 : vector<1x8x512xf32> to vector<8x512xf32>
    %43 = arith.truncf %39 : vector<8x128xf32> to vector<8x128xbf16>
    %c0_16 = arith.constant 0 : index
    %c0_17 = arith.constant 0 : index
    %44 = vector.load %arg1[%c0_16, %c0_17] : memref<128x512xbf16, #tpu.memory_space<vmem>>, vector<128x512xbf16>
    %cst_18 = arith.constant dense<0.000000e+00> : vector<8x512xf32>
    %45 = tpu.matmul %43, %44, %cst_18 {dimension_numbers = #tpu.dot_dimension_numbers<[1], [0], [0], [1], [0, 0, 1, 1], [], []>} : vector<8x128xbf16>, vector<128x512xbf16>, vector<8x512xf32> -> vector<8x512xf32>
    %46 = arith.addf %42, %45 : vector<8x512xf32>
    %47 = vector.extract_strided_slice %46 {offsets = [0, 0], sizes = [8, 128], strides = [1, 1]} : vector<8x512xf32> to vector<8x128xf32>
    %cst_19 = arith.constant 5.000000e-01 : f32
    %48 = vector.broadcast %cst_19 : f32 to vector<8x128xf32>
    %49 = arith.mulf %48, %47 : vector<8x128xf32>
    %50 = math.tanh %49 : vector<8x128xf32>
    %cst_20 = arith.constant 5.000000e-01 : f32
    %51 = vector.broadcast %cst_20 : f32 to vector<8x128xf32>
    %52 = arith.mulf %51, %50 : vector<8x128xf32>
    %cst_21 = arith.constant 5.000000e-01 : f32
    %53 = vector.broadcast %cst_21 : f32 to vector<8x128xf32>
    %54 = arith.addf %53, %52 : vector<8x128xf32>
    %55 = vector.extract_strided_slice %46 {offsets = [0, 128], sizes = [8, 128], strides = [1, 1]} : vector<8x512xf32> to vector<8x128xf32>
    %cst_22 = arith.constant 5.000000e-01 : f32
    %56 = vector.broadcast %cst_22 : f32 to vector<8x128xf32>
    %57 = arith.mulf %56, %55 : vector<8x128xf32>
    %58 = math.tanh %57 : vector<8x128xf32>
    %cst_23 = arith.constant 5.000000e-01 : f32
    %59 = vector.broadcast %cst_23 : f32 to vector<8x128xf32>
    %60 = arith.mulf %59, %58 : vector<8x128xf32>
    %cst_24 = arith.constant 5.000000e-01 : f32
    %61 = vector.broadcast %cst_24 : f32 to vector<8x128xf32>
    %62 = arith.addf %61, %60 : vector<8x128xf32>
    %63 = vector.extract_strided_slice %46 {offsets = [0, 256], sizes = [8, 128], strides = [1, 1]} : vector<8x512xf32> to vector<8x128xf32>
    %64 = math.tanh %63 : vector<8x128xf32>
    %65 = vector.extract_strided_slice %46 {offsets = [0, 384], sizes = [8, 128], strides = [1, 1]} : vector<8x512xf32> to vector<8x128xf32>
    %cst_25 = arith.constant 5.000000e-01 : f32
    %66 = vector.broadcast %cst_25 : f32 to vector<8x128xf32>
    %67 = arith.mulf %66, %65 : vector<8x128xf32>
    %68 = math.tanh %67 : vector<8x128xf32>
    %cst_26 = arith.constant 5.000000e-01 : f32
    %69 = vector.broadcast %cst_26 : f32 to vector<8x128xf32>
    %70 = arith.mulf %69, %68 : vector<8x128xf32>
    %cst_27 = arith.constant 5.000000e-01 : f32
    %71 = vector.broadcast %cst_27 : f32 to vector<8x128xf32>
    %72 = arith.addf %71, %70 : vector<8x128xf32>
    %73 = arith.mulf %62, %37 : vector<8x128xf32>
    %74 = arith.mulf %54, %64 : vector<8x128xf32>
    %75 = arith.addf %73, %74 : vector<8x128xf32>
    %76 = math.tanh %75 : vector<8x128xf32>
    %77 = arith.mulf %72, %76 : vector<8x128xf32>
    %c2_i32 = arith.constant 2 : i32
    %78 = arith.index_cast %c2_i32 : i32 to index
    %c0_28 = arith.constant 0 : index
    %c0_29 = arith.constant 0 : index
    %79 = vector.load %arg0[%78, %c0_28, %c0_29] : memref<8x8x512xf32, #tpu.memory_space<vmem>>, vector<1x8x512xf32>
    %80 = vector.shape_cast %79 : vector<1x8x512xf32> to vector<8x512xf32>
    %81 = arith.truncf %77 : vector<8x128xf32> to vector<8x128xbf16>
    %c0_30 = arith.constant 0 : index
    %c0_31 = arith.constant 0 : index
    %82 = vector.load %arg1[%c0_30, %c0_31] : memref<128x512xbf16, #tpu.memory_space<vmem>>, vector<128x512xbf16>
    %cst_32 = arith.constant dense<0.000000e+00> : vector<8x512xf32>
    %83 = tpu.matmul %81, %82, %cst_32 {dimension_numbers = #tpu.dot_dimension_numbers<[1], [0], [0], [1], [0, 0, 1, 1], [], []>} : vector<8x128xbf16>, vector<128x512xbf16>, vector<8x512xf32> -> vector<8x512xf32>
    %84 = arith.addf %80, %83 : vector<8x512xf32>
    %85 = vector.extract_strided_slice %84 {offsets = [0, 0], sizes = [8, 128], strides = [1, 1]} : vector<8x512xf32> to vector<8x128xf32>
    %cst_33 = arith.constant 5.000000e-01 : f32
    %86 = vector.broadcast %cst_33 : f32 to vector<8x128xf32>
    %87 = arith.mulf %86, %85 : vector<8x128xf32>
    %88 = math.tanh %87 : vector<8x128xf32>
    %cst_34 = arith.constant 5.000000e-01 : f32
    %89 = vector.broadcast %cst_34 : f32 to vector<8x128xf32>
    %90 = arith.mulf %89, %88 : vector<8x128xf32>
    %cst_35 = arith.constant 5.000000e-01 : f32
    %91 = vector.broadcast %cst_35 : f32 to vector<8x128xf32>
    %92 = arith.addf %91, %90 : vector<8x128xf32>
    %93 = vector.extract_strided_slice %84 {offsets = [0, 128], sizes = [8, 128], strides = [1, 1]} : vector<8x512xf32> to vector<8x128xf32>
    %cst_36 = arith.constant 5.000000e-01 : f32
    %94 = vector.broadcast %cst_36 : f32 to vector<8x128xf32>
    %95 = arith.mulf %94, %93 : vector<8x128xf32>
    %96 = math.tanh %95 : vector<8x128xf32>
    %cst_37 = arith.constant 5.000000e-01 : f32
    %97 = vector.broadcast %cst_37 : f32 to vector<8x128xf32>
    %98 = arith.mulf %97, %96 : vector<8x128xf32>
    %cst_38 = arith.constant 5.000000e-01 : f32
    %99 = vector.broadcast %cst_38 : f32 to vector<8x128xf32>
    %100 = arith.addf %99, %98 : vector<8x128xf32>
    %101 = vector.extract_strided_slice %84 {offsets = [0, 256], sizes = [8, 128], strides = [1, 1]} : vector<8x512xf32> to vector<8x128xf32>
    %102 = math.tanh %101 : vector<8x128xf32>
    %103 = vector.extract_strided_slice %84 {offsets = [0, 384], sizes = [8, 128], strides = [1, 1]} : vector<8x512xf32> to vector<8x128xf32>
    %cst_39 = arith.constant 5.000000e-01 : f32
    %104 = vector.broadcast %cst_39 : f32 to vector<8x128xf32>
    %105 = arith.mulf %104, %103 : vector<8x128xf32>
    %106 = math.tanh %105 : vector<8x128xf32>
    %cst_40 = arith.constant 5.000000e-01 : f32
    %107 = vector.broadcast %cst_40 : f32 to vector<8x128xf32>
    %108 = arith.mulf %107, %106 : vector<8x128xf32>
    %cst_41 = arith.constant 5.000000e-01 : f32
    %109 = vector.broadcast %cst_41 : f32 to vector<8x128xf32>
    %110 = arith.addf %109, %108 : vector<8x128xf32>
    %111 = arith.mulf %100, %75 : vector<8x128xf32>
    %112 = arith.mulf %92, %102 : vector<8x128xf32>
    %113 = arith.addf %111, %112 : vector<8x128xf32>
    %114 = math.tanh %113 : vector<8x128xf32>
    %115 = arith.mulf %110, %114 : vector<8x128xf32>
    %c3_i32 = arith.constant 3 : i32
    %116 = arith.index_cast %c3_i32 : i32 to index
    %c0_42 = arith.constant 0 : index
    %c0_43 = arith.constant 0 : index
    %117 = vector.load %arg0[%116, %c0_42, %c0_43] : memref<8x8x512xf32, #tpu.memory_space<vmem>>, vector<1x8x512xf32>
    %118 = vector.shape_cast %117 : vector<1x8x512xf32> to vector<8x512xf32>
    %119 = arith.truncf %115 : vector<8x128xf32> to vector<8x128xbf16>
    %c0_44 = arith.constant 0 : index
    %c0_45 = arith.constant 0 : index
    %120 = vector.load %arg1[%c0_44, %c0_45] : memref<128x512xbf16, #tpu.memory_space<vmem>>, vector<128x512xbf16>
    %cst_46 = arith.constant dense<0.000000e+00> : vector<8x512xf32>
    %121 = tpu.matmul %119, %120, %cst_46 {dimension_numbers = #tpu.dot_dimension_numbers<[1], [0], [0], [1], [0, 0, 1, 1], [], []>} : vector<8x128xbf16>, vector<128x512xbf16>, vector<8x512xf32> -> vector<8x512xf32>
    %122 = arith.addf %118, %121 : vector<8x512xf32>
    %123 = vector.extract_strided_slice %122 {offsets = [0, 0], sizes = [8, 128], strides = [1, 1]} : vector<8x512xf32> to vector<8x128xf32>
    %cst_47 = arith.constant 5.000000e-01 : f32
    %124 = vector.broadcast %cst_47 : f32 to vector<8x128xf32>
    %125 = arith.mulf %124, %123 : vector<8x128xf32>
    %126 = math.tanh %125 : vector<8x128xf32>
    %cst_48 = arith.constant 5.000000e-01 : f32
    %127 = vector.broadcast %cst_48 : f32 to vector<8x128xf32>
    %128 = arith.mulf %127, %126 : vector<8x128xf32>
    %cst_49 = arith.constant 5.000000e-01 : f32
    %129 = vector.broadcast %cst_49 : f32 to vector<8x128xf32>
    %130 = arith.addf %129, %128 : vector<8x128xf32>
    %131 = vector.extract_strided_slice %122 {offsets = [0, 128], sizes = [8, 128], strides = [1, 1]} : vector<8x512xf32> to vector<8x128xf32>
    %cst_50 = arith.constant 5.000000e-01 : f32
    %132 = vector.broadcast %cst_50 : f32 to vector<8x128xf32>
    %133 = arith.mulf %132, %131 : vector<8x128xf32>
    %134 = math.tanh %133 : vector<8x128xf32>
    %cst_51 = arith.constant 5.000000e-01 : f32
    %135 = vector.broadcast %cst_51 : f32 to vector<8x128xf32>
    %136 = arith.mulf %135, %134 : vector<8x128xf32>
    %cst_52 = arith.constant 5.000000e-01 : f32
    %137 = vector.broadcast %cst_52 : f32 to vector<8x128xf32>
    %138 = arith.addf %137, %136 : vector<8x128xf32>
    %139 = vector.extract_strided_slice %122 {offsets = [0, 256], sizes = [8, 128], strides = [1, 1]} : vector<8x512xf32> to vector<8x128xf32>
    %140 = math.tanh %139 : vector<8x128xf32>
    %141 = vector.extract_strided_slice %122 {offsets = [0, 384], sizes = [8, 128], strides = [1, 1]} : vector<8x512xf32> to vector<8x128xf32>
    %cst_53 = arith.constant 5.000000e-01 : f32
    %142 = vector.broadcast %cst_53 : f32 to vector<8x128xf32>
    %143 = arith.mulf %142, %141 : vector<8x128xf32>
    %144 = math.tanh %143 : vector<8x128xf32>
    %cst_54 = arith.constant 5.000000e-01 : f32
    %145 = vector.broadcast %cst_54 : f32 to vector<8x128xf32>
    %146 = arith.mulf %145, %144 : vector<8x128xf32>
    %cst_55 = arith.constant 5.000000e-01 : f32
    %147 = vector.broadcast %cst_55 : f32 to vector<8x128xf32>
    %148 = arith.addf %147, %146 : vector<8x128xf32>
    %149 = arith.mulf %138, %113 : vector<8x128xf32>
    %150 = arith.mulf %130, %140 : vector<8x128xf32>
    %151 = arith.addf %149, %150 : vector<8x128xf32>
    %152 = math.tanh %151 : vector<8x128xf32>
    %153 = arith.mulf %148, %152 : vector<8x128xf32>
    %c4_i32 = arith.constant 4 : i32
    %154 = arith.index_cast %c4_i32 : i32 to index
    %c0_56 = arith.constant 0 : index
    %c0_57 = arith.constant 0 : index
    %155 = vector.load %arg0[%154, %c0_56, %c0_57] : memref<8x8x512xf32, #tpu.memory_space<vmem>>, vector<1x8x512xf32>
    %156 = vector.shape_cast %155 : vector<1x8x512xf32> to vector<8x512xf32>
    %157 = arith.truncf %153 : vector<8x128xf32> to vector<8x128xbf16>
    %c0_58 = arith.constant 0 : index
    %c0_59 = arith.constant 0 : index
    %158 = vector.load %arg1[%c0_58, %c0_59] : memref<128x512xbf16, #tpu.memory_space<vmem>>, vector<128x512xbf16>
    %cst_60 = arith.constant dense<0.000000e+00> : vector<8x512xf32>
    %159 = tpu.matmul %157, %158, %cst_60 {dimension_numbers = #tpu.dot_dimension_numbers<[1], [0], [0], [1], [0, 0, 1, 1], [], []>} : vector<8x128xbf16>, vector<128x512xbf16>, vector<8x512xf32> -> vector<8x512xf32>
    %160 = arith.addf %156, %159 : vector<8x512xf32>
    %161 = vector.extract_strided_slice %160 {offsets = [0, 0], sizes = [8, 128], strides = [1, 1]} : vector<8x512xf32> to vector<8x128xf32>
    %cst_61 = arith.constant 5.000000e-01 : f32
    %162 = vector.broadcast %cst_61 : f32 to vector<8x128xf32>
    %163 = arith.mulf %162, %161 : vector<8x128xf32>
    %164 = math.tanh %163 : vector<8x128xf32>
    %cst_62 = arith.constant 5.000000e-01 : f32
    %165 = vector.broadcast %cst_62 : f32 to vector<8x128xf32>
    %166 = arith.mulf %165, %164 : vector<8x128xf32>
    %cst_63 = arith.constant 5.000000e-01 : f32
    %167 = vector.broadcast %cst_63 : f32 to vector<8x128xf32>
    %168 = arith.addf %167, %166 : vector<8x128xf32>
    %169 = vector.extract_strided_slice %160 {offsets = [0, 128], sizes = [8, 128], strides = [1, 1]} : vector<8x512xf32> to vector<8x128xf32>
    %cst_64 = arith.constant 5.000000e-01 : f32
    %170 = vector.broadcast %cst_64 : f32 to vector<8x128xf32>
    %171 = arith.mulf %170, %169 : vector<8x128xf32>
    %172 = math.tanh %171 : vector<8x128xf32>
    %cst_65 = arith.constant 5.000000e-01 : f32
    %173 = vector.broadcast %cst_65 : f32 to vector<8x128xf32>
    %174 = arith.mulf %173, %172 : vector<8x128xf32>
    %cst_66 = arith.constant 5.000000e-01 : f32
    %175 = vector.broadcast %cst_66 : f32 to vector<8x128xf32>
    %176 = arith.addf %175, %174 : vector<8x128xf32>
    %177 = vector.extract_strided_slice %160 {offsets = [0, 256], sizes = [8, 128], strides = [1, 1]} : vector<8x512xf32> to vector<8x128xf32>
    %178 = math.tanh %177 : vector<8x128xf32>
    %179 = vector.extract_strided_slice %160 {offsets = [0, 384], sizes = [8, 128], strides = [1, 1]} : vector<8x512xf32> to vector<8x128xf32>
    %cst_67 = arith.constant 5.000000e-01 : f32
    %180 = vector.broadcast %cst_67 : f32 to vector<8x128xf32>
    %181 = arith.mulf %180, %179 : vector<8x128xf32>
    %182 = math.tanh %181 : vector<8x128xf32>
    %cst_68 = arith.constant 5.000000e-01 : f32
    %183 = vector.broadcast %cst_68 : f32 to vector<8x128xf32>
    %184 = arith.mulf %183, %182 : vector<8x128xf32>
    %cst_69 = arith.constant 5.000000e-01 : f32
    %185 = vector.broadcast %cst_69 : f32 to vector<8x128xf32>
    %186 = arith.addf %185, %184 : vector<8x128xf32>
    %187 = arith.mulf %176, %151 : vector<8x128xf32>
    %188 = arith.mulf %168, %178 : vector<8x128xf32>
    %189 = arith.addf %187, %188 : vector<8x128xf32>
    %190 = math.tanh %189 : vector<8x128xf32>
    %191 = arith.mulf %186, %190 : vector<8x128xf32>
    %c5_i32 = arith.constant 5 : i32
    %192 = arith.index_cast %c5_i32 : i32 to index
    %c0_70 = arith.constant 0 : index
    %c0_71 = arith.constant 0 : index
    %193 = vector.load %arg0[%192, %c0_70, %c0_71] : memref<8x8x512xf32, #tpu.memory_space<vmem>>, vector<1x8x512xf32>
    %194 = vector.shape_cast %193 : vector<1x8x512xf32> to vector<8x512xf32>
    %195 = arith.truncf %191 : vector<8x128xf32> to vector<8x128xbf16>
    %c0_72 = arith.constant 0 : index
    %c0_73 = arith.constant 0 : index
    %196 = vector.load %arg1[%c0_72, %c0_73] : memref<128x512xbf16, #tpu.memory_space<vmem>>, vector<128x512xbf16>
    %cst_74 = arith.constant dense<0.000000e+00> : vector<8x512xf32>
    %197 = tpu.matmul %195, %196, %cst_74 {dimension_numbers = #tpu.dot_dimension_numbers<[1], [0], [0], [1], [0, 0, 1, 1], [], []>} : vector<8x128xbf16>, vector<128x512xbf16>, vector<8x512xf32> -> vector<8x512xf32>
    %198 = arith.addf %194, %197 : vector<8x512xf32>
    %199 = vector.extract_strided_slice %198 {offsets = [0, 0], sizes = [8, 128], strides = [1, 1]} : vector<8x512xf32> to vector<8x128xf32>
    %cst_75 = arith.constant 5.000000e-01 : f32
    %200 = vector.broadcast %cst_75 : f32 to vector<8x128xf32>
    %201 = arith.mulf %200, %199 : vector<8x128xf32>
    %202 = math.tanh %201 : vector<8x128xf32>
    %cst_76 = arith.constant 5.000000e-01 : f32
    %203 = vector.broadcast %cst_76 : f32 to vector<8x128xf32>
    %204 = arith.mulf %203, %202 : vector<8x128xf32>
    %cst_77 = arith.constant 5.000000e-01 : f32
    %205 = vector.broadcast %cst_77 : f32 to vector<8x128xf32>
    %206 = arith.addf %205, %204 : vector<8x128xf32>
    %207 = vector.extract_strided_slice %198 {offsets = [0, 128], sizes = [8, 128], strides = [1, 1]} : vector<8x512xf32> to vector<8x128xf32>
    %cst_78 = arith.constant 5.000000e-01 : f32
    %208 = vector.broadcast %cst_78 : f32 to vector<8x128xf32>
    %209 = arith.mulf %208, %207 : vector<8x128xf32>
    %210 = math.tanh %209 : vector<8x128xf32>
    %cst_79 = arith.constant 5.000000e-01 : f32
    %211 = vector.broadcast %cst_79 : f32 to vector<8x128xf32>
    %212 = arith.mulf %211, %210 : vector<8x128xf32>
    %cst_80 = arith.constant 5.000000e-01 : f32
    %213 = vector.broadcast %cst_80 : f32 to vector<8x128xf32>
    %214 = arith.addf %213, %212 : vector<8x128xf32>
    %215 = vector.extract_strided_slice %198 {offsets = [0, 256], sizes = [8, 128], strides = [1, 1]} : vector<8x512xf32> to vector<8x128xf32>
    %216 = math.tanh %215 : vector<8x128xf32>
    %217 = vector.extract_strided_slice %198 {offsets = [0, 384], sizes = [8, 128], strides = [1, 1]} : vector<8x512xf32> to vector<8x128xf32>
    %cst_81 = arith.constant 5.000000e-01 : f32
    %218 = vector.broadcast %cst_81 : f32 to vector<8x128xf32>
    %219 = arith.mulf %218, %217 : vector<8x128xf32>
    %220 = math.tanh %219 : vector<8x128xf32>
    %cst_82 = arith.constant 5.000000e-01 : f32
    %221 = vector.broadcast %cst_82 : f32 to vector<8x128xf32>
    %222 = arith.mulf %221, %220 : vector<8x128xf32>
    %cst_83 = arith.constant 5.000000e-01 : f32
    %223 = vector.broadcast %cst_83 : f32 to vector<8x128xf32>
    %224 = arith.addf %223, %222 : vector<8x128xf32>
    %225 = arith.mulf %214, %189 : vector<8x128xf32>
    %226 = arith.mulf %206, %216 : vector<8x128xf32>
    %227 = arith.addf %225, %226 : vector<8x128xf32>
    %228 = math.tanh %227 : vector<8x128xf32>
    %229 = arith.mulf %224, %228 : vector<8x128xf32>
    %c6_i32 = arith.constant 6 : i32
    %230 = arith.index_cast %c6_i32 : i32 to index
    %c0_84 = arith.constant 0 : index
    %c0_85 = arith.constant 0 : index
    %231 = vector.load %arg0[%230, %c0_84, %c0_85] : memref<8x8x512xf32, #tpu.memory_space<vmem>>, vector<1x8x512xf32>
    %232 = vector.shape_cast %231 : vector<1x8x512xf32> to vector<8x512xf32>
    %233 = arith.truncf %229 : vector<8x128xf32> to vector<8x128xbf16>
    %c0_86 = arith.constant 0 : index
    %c0_87 = arith.constant 0 : index
    %234 = vector.load %arg1[%c0_86, %c0_87] : memref<128x512xbf16, #tpu.memory_space<vmem>>, vector<128x512xbf16>
    %cst_88 = arith.constant dense<0.000000e+00> : vector<8x512xf32>
    %235 = tpu.matmul %233, %234, %cst_88 {dimension_numbers = #tpu.dot_dimension_numbers<[1], [0], [0], [1], [0, 0, 1, 1], [], []>} : vector<8x128xbf16>, vector<128x512xbf16>, vector<8x512xf32> -> vector<8x512xf32>
    %236 = arith.addf %232, %235 : vector<8x512xf32>
    %237 = vector.extract_strided_slice %236 {offsets = [0, 0], sizes = [8, 128], strides = [1, 1]} : vector<8x512xf32> to vector<8x128xf32>
    %cst_89 = arith.constant 5.000000e-01 : f32
    %238 = vector.broadcast %cst_89 : f32 to vector<8x128xf32>
    %239 = arith.mulf %238, %237 : vector<8x128xf32>
    %240 = math.tanh %239 : vector<8x128xf32>
    %cst_90 = arith.constant 5.000000e-01 : f32
    %241 = vector.broadcast %cst_90 : f32 to vector<8x128xf32>
    %242 = arith.mulf %241, %240 : vector<8x128xf32>
    %cst_91 = arith.constant 5.000000e-01 : f32
    %243 = vector.broadcast %cst_91 : f32 to vector<8x128xf32>
    %244 = arith.addf %243, %242 : vector<8x128xf32>
    %245 = vector.extract_strided_slice %236 {offsets = [0, 128], sizes = [8, 128], strides = [1, 1]} : vector<8x512xf32> to vector<8x128xf32>
    %cst_92 = arith.constant 5.000000e-01 : f32
    %246 = vector.broadcast %cst_92 : f32 to vector<8x128xf32>
    %247 = arith.mulf %246, %245 : vector<8x128xf32>
    %248 = math.tanh %247 : vector<8x128xf32>
    %cst_93 = arith.constant 5.000000e-01 : f32
    %249 = vector.broadcast %cst_93 : f32 to vector<8x128xf32>
    %250 = arith.mulf %249, %248 : vector<8x128xf32>
    %cst_94 = arith.constant 5.000000e-01 : f32
    %251 = vector.broadcast %cst_94 : f32 to vector<8x128xf32>
    %252 = arith.addf %251, %250 : vector<8x128xf32>
    %253 = vector.extract_strided_slice %236 {offsets = [0, 256], sizes = [8, 128], strides = [1, 1]} : vector<8x512xf32> to vector<8x128xf32>
    %254 = math.tanh %253 : vector<8x128xf32>
    %255 = vector.extract_strided_slice %236 {offsets = [0, 384], sizes = [8, 128], strides = [1, 1]} : vector<8x512xf32> to vector<8x128xf32>
    %cst_95 = arith.constant 5.000000e-01 : f32
    %256 = vector.broadcast %cst_95 : f32 to vector<8x128xf32>
    %257 = arith.mulf %256, %255 : vector<8x128xf32>
    %258 = math.tanh %257 : vector<8x128xf32>
    %cst_96 = arith.constant 5.000000e-01 : f32
    %259 = vector.broadcast %cst_96 : f32 to vector<8x128xf32>
    %260 = arith.mulf %259, %258 : vector<8x128xf32>
    %cst_97 = arith.constant 5.000000e-01 : f32
    %261 = vector.broadcast %cst_97 : f32 to vector<8x128xf32>
    %262 = arith.addf %261, %260 : vector<8x128xf32>
    %263 = arith.mulf %252, %227 : vector<8x128xf32>
    %264 = arith.mulf %244, %254 : vector<8x128xf32>
    %265 = arith.addf %263, %264 : vector<8x128xf32>
    %266 = math.tanh %265 : vector<8x128xf32>
    %267 = arith.mulf %262, %266 : vector<8x128xf32>
    %c7_i32 = arith.constant 7 : i32
    %268 = arith.index_cast %c7_i32 : i32 to index
    %c0_98 = arith.constant 0 : index
    %c0_99 = arith.constant 0 : index
    %269 = vector.load %arg0[%268, %c0_98, %c0_99] : memref<8x8x512xf32, #tpu.memory_space<vmem>>, vector<1x8x512xf32>
    %270 = vector.shape_cast %269 : vector<1x8x512xf32> to vector<8x512xf32>
    %271 = arith.truncf %267 : vector<8x128xf32> to vector<8x128xbf16>
    %c0_100 = arith.constant 0 : index
    %c0_101 = arith.constant 0 : index
    %272 = vector.load %arg1[%c0_100, %c0_101] : memref<128x512xbf16, #tpu.memory_space<vmem>>, vector<128x512xbf16>
    %cst_102 = arith.constant dense<0.000000e+00> : vector<8x512xf32>
    %273 = tpu.matmul %271, %272, %cst_102 {dimension_numbers = #tpu.dot_dimension_numbers<[1], [0], [0], [1], [0, 0, 1, 1], [], []>} : vector<8x128xbf16>, vector<128x512xbf16>, vector<8x512xf32> -> vector<8x512xf32>
    %274 = arith.addf %270, %273 : vector<8x512xf32>
    %275 = vector.extract_strided_slice %274 {offsets = [0, 0], sizes = [8, 128], strides = [1, 1]} : vector<8x512xf32> to vector<8x128xf32>
    %cst_103 = arith.constant 5.000000e-01 : f32
    %276 = vector.broadcast %cst_103 : f32 to vector<8x128xf32>
    %277 = arith.mulf %276, %275 : vector<8x128xf32>
    %278 = math.tanh %277 : vector<8x128xf32>
    %cst_104 = arith.constant 5.000000e-01 : f32
    %279 = vector.broadcast %cst_104 : f32 to vector<8x128xf32>
    %280 = arith.mulf %279, %278 : vector<8x128xf32>
    %cst_105 = arith.constant 5.000000e-01 : f32
    %281 = vector.broadcast %cst_105 : f32 to vector<8x128xf32>
    %282 = arith.addf %281, %280 : vector<8x128xf32>
    %283 = vector.extract_strided_slice %274 {offsets = [0, 128], sizes = [8, 128], strides = [1, 1]} : vector<8x512xf32> to vector<8x128xf32>
    %cst_106 = arith.constant 5.000000e-01 : f32
    %284 = vector.broadcast %cst_106 : f32 to vector<8x128xf32>
    %285 = arith.mulf %284, %283 : vector<8x128xf32>
    %286 = math.tanh %285 : vector<8x128xf32>
    %cst_107 = arith.constant 5.000000e-01 : f32
    %287 = vector.broadcast %cst_107 : f32 to vector<8x128xf32>
    %288 = arith.mulf %287, %286 : vector<8x128xf32>
    %cst_108 = arith.constant 5.000000e-01 : f32
    %289 = vector.broadcast %cst_108 : f32 to vector<8x128xf32>
    %290 = arith.addf %289, %288 : vector<8x128xf32>
    %291 = vector.extract_strided_slice %274 {offsets = [0, 256], sizes = [8, 128], strides = [1, 1]} : vector<8x512xf32> to vector<8x128xf32>
    %292 = math.tanh %291 : vector<8x128xf32>
    %293 = vector.extract_strided_slice %274 {offsets = [0, 384], sizes = [8, 128], strides = [1, 1]} : vector<8x512xf32> to vector<8x128xf32>
    %cst_109 = arith.constant 5.000000e-01 : f32
    %294 = vector.broadcast %cst_109 : f32 to vector<8x128xf32>
    %295 = arith.mulf %294, %293 : vector<8x128xf32>
    %296 = math.tanh %295 : vector<8x128xf32>
    %cst_110 = arith.constant 5.000000e-01 : f32
    %297 = vector.broadcast %cst_110 : f32 to vector<8x128xf32>
    %298 = arith.mulf %297, %296 : vector<8x128xf32>
    %cst_111 = arith.constant 5.000000e-01 : f32
    %299 = vector.broadcast %cst_111 : f32 to vector<8x128xf32>
    %300 = arith.addf %299, %298 : vector<8x128xf32>
    %301 = arith.mulf %290, %265 : vector<8x128xf32>
    %302 = arith.mulf %282, %292 : vector<8x128xf32>
    %303 = arith.addf %301, %302 : vector<8x128xf32>
    %304 = math.tanh %303 : vector<8x128xf32>
    %305 = arith.mulf %300, %304 : vector<8x128xf32>
    %c8_i32 = arith.constant 8 : i32
    %c0_112 = arith.constant 0 : index
    %c0_113 = arith.constant 0 : index
    %306 = vector.load %arg2[%c0_112, %c0_113] : memref<1x128xf32, #tpu.memory_space<vmem>>, vector<1x128xf32>
    %307 = vector.broadcast %306 : vector<1x128xf32> to vector<8x128xf32>
    %308 = arith.mulf %305, %307 : vector<8x128xf32>
    %cst_114 = arith.constant dense<0.000000e+00> : vector<8xf32>
    %309 = vector.multi_reduction <add>, %308, %cst_114 [1] : vector<8x128xf32> to vector<8xf32>
    %310 = vector.shape_cast %309 : vector<8xf32> to vector<8x1xf32>
    %c0_115 = arith.constant 0 : index
    %c0_116 = arith.constant 0 : index
    %311 = vector.load %arg3[%c0_115, %c0_116] : memref<1x1xf32, #tpu.memory_space<vmem>>, vector<1x1xf32>
    %312 = vector.broadcast %311 : vector<1x1xf32> to vector<8x1xf32>
    %313 = arith.addf %310, %312 : vector<8x1xf32>
    %c0_117 = arith.constant 0 : index
    %c0_118 = arith.constant 0 : index
    %314 = vector.load %arg4[%c0_117, %c0_118] : memref<8x1xf32, #tpu.memory_space<vmem>>, vector<8x1xf32>
    tpu.vector_store %arg4[%c0_117, %c0_118], %313 {strides = array<i32>} : memref<8x1xf32, #tpu.memory_space<vmem>>, vector<8x1xf32>,
    return
  }
}

</mosaic_0001>

<llo_original>
// kernel: tpu_custom_call.1
$region0: #{tpu_custom_call.1}
  #allocation0 [shape = 'u32[]', space=smem, size = 0x4, offset = 0x4, fixed_abs, tag = 'smem constant byte address 0x4 - core index']
  #allocation1 [shape = 'u32[72,128]{1,0:T(1,128)}', space=vmem, size = 0x9000, scoped, tag = 'internal scratch']
  #allocation2 [shape = 'f32[1,1]{1,0:T(1,128)S(1)}', space=vmem, size = 0x200, scoped, tag = 'scoped memory for tpu_custom_call.1']
  %s0 = inlined_call_operand.hbm [shape: f32[8,8,512], index: 0, kind: input, shape index: {}]
  %s1 = inlined_call_operand.hbm [shape: bf16[128,512], index: 1, kind: input, shape index: {}]
  %s2 = inlined_call_operand.vmem [shape: f32[1,128], index: 2, kind: input, shape index: {}]
  %s3 = inlined_call_operand.<no memory space> [shape: f32[1,1], index: 3, kind: input, shape index: {}]
  %s4 = inlined_call_operand.vmem [shape: f32[8,1], index: 4, kind: output, shape index: {}]
  %s5 = sld [smem:[#allocation0]]
  $region34: #{tpu_custom_call.1} parent=0
    _
  %s7 = ssub.s32 1, %s5
  %s8 = scalar_select 0, %s7, %s5
  %v9 = vstv %s3
  %10 = vst [vmem:[#allocation2] sm:$0x1] %v9
  $region1: #{tpu_custom_call.1} parent=0
    #allocation3 [shape = 'u8[131072]{0}', space=vmem, size = 0x20000, scoped, tag = 'input window, operand 0, single buffered']
    #allocation4 [shape = 's32[1]{0}', space=sflag, size = 0x4, scoped, tag = 'scoped memory for tpu_custom_call.1']
    #allocation5 [shape = 'u8[131072]{0}', space=vmem, size = 0x20000, scoped, tag = 'input window, operand 1, single buffered']
    #allocation6 [shape = 's32[1]{0}', space=sflag, size = 0x4, scoped, tag = 'scoped memory for tpu_custom_call.1']
    %11 = vsyncpa [#allocation4], 0
    %12 = vsyncpa [#allocation6], 0
    // Predicated region
    $region2: #{tpu_custom_call.1} parent=1 // pred_check
      _
    $region3: #{tpu_custom_call.1} parent=1 // pred_check_branch
      %14 = sbr.rel (0) target = $region5
    $region4: #{tpu_custom_call.1} parent=1 // pred_region
      %16 = vsyncadd [#allocation4], 0
      %s17 = sshll.u32 %s0, 4
      %s18 = int_to_ptr.hbm [resolvable:$true] %s17
      %s19 = sshll.u32 [#allocation3], 4
      %s20 = int_to_ptr.vmem [resolvable:$true] %s19
      %25 = dma.hbm_to_vmem [thread:$0]  %s18, 4096, %s20, [#allocation4], 512, 512, 32
    $region5: #{tpu_custom_call.1} parent=1 // pred_fallthru
      _
    // Predicated region
    $region6: #{tpu_custom_call.1} parent=1 // pred_check
      _
    $region7: #{tpu_custom_call.1} parent=1 // pred_check_branch
      %27 = sbr.rel (0) target = $region9
    $region8: #{tpu_custom_call.1} parent=1 // pred_region
      %29 = vsyncadd [#allocation6], 0
      %s30 = sshll.u32 %s1, 4
      %s31 = int_to_ptr.hbm [resolvable:$true] %s30
      %s32 = sshll.u32 [#allocation5], 4
      %s33 = int_to_ptr.vmem [resolvable:$true] %s32
      %38 = dma.hbm_to_vmem [thread:$0]  %s31, 4096, %s33, [#allocation6], 256, 256, 16
    $region9: #{tpu_custom_call.1} parent=1 // pred_fallthru
      _
    // Predicated region
    $region10: #{tpu_custom_call.1} parent=1 // pred_check
      _
    $region11: #{tpu_custom_call.1} parent=1 // pred_check_branch
      %40 = sbr.rel (0) target = $region13
    $region12: #{tpu_custom_call.1} parent=1 // pred_region
      _
    $region13: #{tpu_custom_call.1} parent=1 // pred_fallthru
      _
    // Predicated region
    $region14: #{tpu_custom_call.1} parent=1 // pred_check
      _
    $region15: #{tpu_custom_call.1} parent=1 // pred_check_branch
      %42 = sbr.rel (0) target = $region17
    $region16: #{tpu_custom_call.1} parent=1 // pred_region
      _
    $region17: #{tpu_custom_call.1} parent=1 // pred_fallthru
      _
    // Predicated region
    $region18: #{tpu_custom_call.1} parent=1 // pred_check
      _
    $region19: #{tpu_custom_call.1} parent=1 // pred_check_branch
      %44 = sbr.rel (0) target = $region21
    $region20: #{tpu_custom_call.1} parent=1 // pred_region
      %46 = dma.done [#allocation4], 4096
    $region21: #{tpu_custom_call.1} parent=1 // pred_fallthru
      _
    // Predicated region
    $region22: #{tpu_custom_call.1} parent=1 // pred_check
      _
    $region23: #{tpu_custom_call.1} parent=1 // pred_check_branch
      %48 = sbr.rel (0) target = $region25
    $region24: #{tpu_custom_call.1} parent=1 // pred_region
      %50 = dma.done [#allocation6], 4096
    $region25: #{tpu_custom_call.1} parent=1 // pred_fallthru
      _
    %v52 = vld [vmem:[#allocation3] sm:$0xff]
    %v53 = vld [vmem:[#allocation3 + $0x8] sm:$0xff]
    %v54 = vld [vmem:[#allocation3 + $0x10] sm:$0xff]
    %v55 = vld [vmem:[#allocation3 + $0x18] sm:$0xff]
    %v56 = vld [vmem:[#allocation5] sm:$0xff]
    %v57 = vld [vmem:[#allocation5 + $0x8] sm:$0xff]
    %v58 = vld [vmem:[#allocation5 + $0x10] sm:$0xff]
    %v59 = vld [vmem:[#allocation5 + $0x18] sm:$0xff]
    %v60 = vld [vmem:[#allocation5 + $0x20] sm:$0xff]
    %v61 = vld [vmem:[#allocation5 + $0x28] sm:$0xff]
    %v62 = vld [vmem:[#allocation5 + $0x30] sm:$0xff]
    %v63 = vld [vmem:[#allocation5 + $0x38] sm:$0xff]
    %v64 = vld [vmem:[#allocation5 + $0x40] sm:$0xff]
    %v65 = vld [vmem:[#allocation5 + $0x48] sm:$0xff]
    %v66 = vld [vmem:[#allocation5 + $0x50] sm:$0xff]
    %v67 = vld [vmem:[#allocation5 + $0x58] sm:$0xff]
    %v68 = vld [vmem:[#allocation5 + $0x60] sm:$0xff]
    %v69 = vld [vmem:[#allocation5 + $0x68] sm:$0xff]
    %v70 = vld [vmem:[#allocation5 + $0x70] sm:$0xff]
    %v71 = vld [vmem:[#allocation5 + $0x78] sm:$0xff]
    %v72 = vld [vmem:[#allocation5 + $0x80] sm:$0xff]
    %v73 = vld [vmem:[#allocation5 + $0x88] sm:$0xff]
    %v74 = vld [vmem:[#allocation5 + $0x90] sm:$0xff]
    %v75 = vld [vmem:[#allocation5 + $0x98] sm:$0xff]
    %v76 = vld [vmem:[#allocation5 + $0xa0] sm:$0xff]
    %v77 = vld [vmem:[#allocation5 + $0xa8] sm:$0xff]
    %v78 = vld [vmem:[#allocation5 + $0xb0] sm:$0xff]
    %v79 = vld [vmem:[#allocation5 + $0xb8] sm:$0xff]
    %v80 = vld [vmem:[#allocation5 + $0xc0] sm:$0xff]
    %v81 = vld [vmem:[#allocation5 + $0xc8] sm:$0xff]
    %v82 = vld [vmem:[#allocation5 + $0xd0] sm:$0xff]
    %v83 = vld [vmem:[#allocation5 + $0xd8] sm:$0xff]
    %v84 = vld [vmem:[#allocation5 + $0xe0] sm:$0xff]
    %v85 = vld [vmem:[#allocation5 + $0xe8] sm:$0xff]
    %v86 = vld [vmem:[#allocation5 + $0xf0] sm:$0xff]
    %v87 = vld [vmem:[#allocation5 + $0xf8] sm:$0xff]
    %v120 = vunpack.c.l.b16 %v56
    %v121 = vunpack.c.h.b16 %v56
    %v122 = vunpack.c.l.b16 %v57
    %v123 = vunpack.c.h.b16 %v57
    %v124 = vunpack.c.l.b16 %v58
    %v125 = vunpack.c.h.b16 %v58
    %v126 = vunpack.c.l.b16 %v59
    %v127 = vunpack.c.h.b16 %v59
    %v128 = vunpack.c.l.b16 %v60
    %v129 = vunpack.c.h.b16 %v60
    %v130 = vunpack.c.l.b16 %v61
    %v131 = vunpack.c.h.b16 %v61
    %v132 = vunpack.c.l.b16 %v62
    %v133 = vunpack.c.h.b16 %v62
    %v134 = vunpack.c.l.b16 %v63
    %v135 = vunpack.c.h.b16 %v63
    %v136 = vunpack.c.l.b16 %v64
    %v137 = vunpack.c.h.b16 %v64
    %v138 = vunpack.c.l.b16 %v65
    %v139 = vunpack.c.h.b16 %v65
    %v140 = vunpack.c.l.b16 %v66
    %v141 = vunpack.c.h.b16 %v66
    %v142 = vunpack.c.l.b16 %v67
    %v143 = vunpack.c.h.b16 %v67
    %v144 = vunpack.c.l.b16 %v68
    %v145 = vunpack.c.h.b16 %v68
    %v146 = vunpack.c.l.b16 %v69
    %v147 = vunpack.c.h.b16 %v69
    %v148 = vunpack.c.l.b16 %v70
    %v149 = vunpack.c.h.b16 %v70
    %v150 = vunpack.c.l.b16 %v71
    %v151 = vunpack.c.h.b16 %v71
    %v152 = vunpack.c.l.b16 %v72
    %v153 = vunpack.c.h.b16 %v72
    %v154 = vunpack.c.l.b16 %v73
    %v155 = vunpack.c.h.b16 %v73
    %v156 = vunpack.c.l.b16 %v74
    %v157 = vunpack.c.h.b16 %v74
    %v158 = vunpack.c.l.b16 %v75
    %v159 = vunpack.c.h.b16 %v75
    %v160 = vunpack.c.l.b16 %v76
    %v161 = vunpack.c.h.b16 %v76
    %v162 = vunpack.c.l.b16 %v77
    %v163 = vunpack.c.h.b16 %v77
    %v164 = vunpack.c.l.b16 %v78
    %v165 = vunpack.c.h.b16 %v78
    %v166 = vunpack.c.l.b16 %v79
    %v167 = vunpack.c.h.b16 %v79
    %v168 = vunpack.c.l.b16 %v80
    %v169 = vunpack.c.h.b16 %v80
    %v170 = vunpack.c.l.b16 %v81
    %v171 = vunpack.c.h.b16 %v81
    %v172 = vunpack.c.l.b16 %v82
    %v173 = vunpack.c.h.b16 %v82
    %v174 = vunpack.c.l.b16 %v83
    %v175 = vunpack.c.h.b16 %v83
    %v176 = vunpack.c.l.b16 %v84
    %v177 = vunpack.c.h.b16 %v84
    %v178 = vunpack.c.l.b16 %v85
    %v179 = vunpack.c.h.b16 %v85
    %v180 = vunpack.c.l.b16 %v86
    %v181 = vunpack.c.h.b16 %v86
    %v182 = vunpack.c.l.b16 %v87
    %v183 = vunpack.c.h.b16 %v87
    %v184 = vpack.c.b16 %v124, %v120
    %v185 = vpack.c.b16 %v125, %v121
    %v186 = vpack.c.b16 %v126, %v122
    %v187 = vpack.c.b16 %v127, %v123
    %v188 = vpack.c.b16 %v132, %v128
    %v189 = vpack.c.b16 %v133, %v129
    %v190 = vpack.c.b16 %v134, %v130
    %v191 = vpack.c.b16 %v135, %v131
    %v192 = vpack.c.b16 %v140, %v136
    %v193 = vpack.c.b16 %v141, %v137
    %v194 = vpack.c.b16 %v142, %v138
    %v195 = vpack.c.b16 %v143, %v139
    %v196 = vpack.c.b16 %v148, %v144
    %v197 = vpack.c.b16 %v149, %v145
    %v198 = vpack.c.b16 %v150, %v146
    %v199 = vpack.c.b16 %v151, %v147
    %v200 = vpack.c.b16 %v156, %v152
    %v201 = vpack.c.b16 %v157, %v153
    %v202 = vpack.c.b16 %v158, %v154
    %v203 = vpack.c.b16 %v159, %v155
    %v204 = vpack.c.b16 %v164, %v160
    %v205 = vpack.c.b16 %v165, %v161
    %v206 = vpack.c.b16 %v166, %v162
    %v207 = vpack.c.b16 %v167, %v163
    %v208 = vpack.c.b16 %v172, %v168
    %v209 = vpack.c.b16 %v173, %v169
    %v210 = vpack.c.b16 %v174, %v170
    %v211 = vpack.c.b16 %v175, %v171
    %v212 = vpack.c.b16 %v180, %v176
    %v213 = vpack.c.b16 %v181, %v177
    %v214 = vpack.c.b16 %v182, %v178
    %v215 = vpack.c.b16 %v183, %v179
    %248 = vmatpush.bf16.msra.mxu0 %v212
    %249 = vmatpush.bf16.msra.mxu0 %v208
    %250 = vmatpush.bf16.msra.mxu0 %v204
    %251 = vmatpush.bf16.msra.mxu0 %v200
    %252 = vmatpush.bf16.msra.mxu0 %v196
    %253 = vmatpush.bf16.msra.mxu0 %v192
    %254 = vmatpush.bf16.msra.mxu0 %v188
    %255 = vmatpush.bf16.msra.mxu0 %v184
    %256 = vmatmul.bf16.gmra.mxu0 0
    %v257 = vpop.f32.mrf.mxu0
    %v258 = vadd.f32 0.0, %v257
    %v259 = vpop.f32.mrf.mxu0
    %260 = vdwg.mxu0
    %261 = vmatpush.bf16.msra.mxu0 %v213
    %262 = vmatpush.bf16.msra.mxu0 %v209
    %263 = vmatpush.bf16.msra.mxu0 %v205
    %264 = vmatpush.bf16.msra.mxu0 %v201
    %265 = vmatpush.bf16.msra.mxu0 %v197
    %266 = vmatpush.bf16.msra.mxu0 %v193
    %267 = vmatpush.bf16.msra.mxu0 %v189
    %268 = vmatpush.bf16.msra.mxu0 %v185
    %269 = vmatmul.bf16.gmra.mxu0 0
    %v270 = vpop.f32.mrf.mxu0
    %v271 = vadd.f32 0.0, %v270
    %v272 = vpop.f32.mrf.mxu0
    %273 = vdwg.mxu0
    %274 = vmatpush.bf16.msra.mxu0 %v214
    %275 = vmatpush.bf16.msra.mxu0 %v210
    %276 = vmatpush.bf16.msra.mxu0 %v206
    %277 = vmatpush.bf16.msra.mxu0 %v202
    %278 = vmatpush.bf16.msra.mxu0 %v198
    %279 = vmatpush.bf16.msra.mxu0 %v194
    %280 = vmatpush.bf16.msra.mxu0 %v190
    %281 = vmatpush.bf16.msra.mxu0 %v186
    %282 = vmatmul.bf16.gmra.mxu0 0
    %v283 = vpop.f32.mrf.mxu0
    %v284 = vadd.f32 0.0, %v283
    %v285 = vpop.f32.mrf.mxu0
    %286 = vdwg.mxu0
    %287 = vmatpush.bf16.msra.mxu0 %v215
    %288 = vmatpush.bf16.msra.mxu0 %v211
    %289 = vmatpush.bf16.msra.mxu0 %v207
    %290 = vmatpush.bf16.msra.mxu0 %v203
    %291 = vmatpush.bf16.msra.mxu0 %v199
    %292 = vmatpush.bf16.msra.mxu0 %v195
    %293 = vmatpush.bf16.msra.mxu0 %v191
    %294 = vmatpush.bf16.msra.mxu0 %v187
    %295 = vmatmul.bf16.gmra.mxu0 0
    %v296 = vpop.f32.mrf.mxu0
    %v297 = vadd.f32 0.0, %v296
    %v298 = vpop.f32.mrf.mxu0
    %299 = vdwg.mxu0
    %v300 = vadd.f32 %v52, %v258
    %v301 = vadd.f32 %v53, %v271
    %v302 = vadd.f32 %v54, %v284
    %v303 = vadd.f32 %v55, %v297
    %v304 = vmul.f32 %v300, 0.5
    %v305 = vtanh.pop %v304
    %v306 = vmul.f32 %v305, 0.5
    %v307 = vadd.f32 %v306, 0.5
    %v308 = vmul.f32 %v301, 0.5
    %v309 = vtanh.pop %v308
    %v310 = vmul.f32 %v309, 0.5
    %v311 = vadd.f32 %v310, 0.5
    %v312 = vtanh.pop %v302
    %v313 = vmul.f32 %v303, 0.5
    %v314 = vtanh.pop %v313
    %v315 = vmul.f32 %v314, 0.5
    %v316 = vadd.f32 %v315, 0.5
    %v317 = vmul.f32 %v311, 0.0
    %v318 = vmul.f32 %v307, %v312
    %v319 = vadd.f32 %v317, %v318
    %v320 = vtanh.pop %v319
    %v321 = vmul.f32 %v316, %v320
    %s322 = scalar_lea.vmem [#allocation3], 32
    %v323 = vld [vmem:[%s322] sm:$0xff]
    %v324 = vld [vmem:[%s322 + $0x8] sm:$0xff]
    %v325 = vld [vmem:[%s322 + $0x10] sm:$0xff]
    %v326 = vld [vmem:[%s322 + $0x18] sm:$0xff]
    %v327 = vpack.c.bf16 %v321, %v321
    %328 = vmatpush.bf16.msra.mxu0 %v212
    %329 = vmatpush.bf16.msra.mxu0 %v208
    %330 = vmatpush.bf16.msra.mxu0 %v204
    %331 = vmatpush.bf16.msra.mxu0 %v200
    %332 = vmatpush.bf16.msra.mxu0 %v196
    %333 = vmatpush.bf16.msra.mxu0 %v192
    %334 = vmatpush.bf16.msra.mxu0 %v188
    %335 = vmatpush.bf16.msra.mxu0 %v184
    %336 = vmatmul.bf16.gmra.mxu0 %v327
    %v337 = vpop.f32.mrf.mxu0
    %v338 = vadd.f32 0.0, %v337
    %v339 = vpop.f32.mrf.mxu0
    %340 = vdwg.mxu0
    %341 = vmatpush.bf16.msra.mxu0 %v213
    %342 = vmatpush.bf16.msra.mxu0 %v209
    %343 = vmatpush.bf16.msra.mxu0 %v205
    %344 = vmatpush.bf16.msra.mxu0 %v201
    %345 = vmatpush.bf16.msra.mxu0 %v197
    %346 = vmatpush.bf16.msra.mxu0 %v193
    %347 = vmatpush.bf16.msra.mxu0 %v189
    %348 = vmatpush.bf16.msra.mxu0 %v185
    %349 = vmatmul.bf16.gmra.mxu0 %v327
    %v350 = vpop.f32.mrf.mxu0
    %v351 = vadd.f32 0.0, %v350
    %v352 = vpop.f32.mrf.mxu0
    %353 = vdwg.mxu0
    %354 = vmatpush.bf16.msra.mxu0 %v214
    %355 = vmatpush.bf16.msra.mxu0 %v210
    %356 = vmatpush.bf16.msra.mxu0 %v206
    %357 = vmatpush.bf16.msra.mxu0 %v202
    %358 = vmatpush.bf16.msra.mxu0 %v198
    %359 = vmatpush.bf16.msra.mxu0 %v194
    %360 = vmatpush.bf16.msra.mxu0 %v190
    %361 = vmatpush.bf16.msra.mxu0 %v186
    %362 = vmatmul.bf16.gmra.mxu0 %v327
    %v363 = vpop.f32.mrf.mxu0
    %v364 = vadd.f32 0.0, %v363
    %v365 = vpop.f32.mrf.mxu0
    %366 = vdwg.mxu0
    %367 = vmatpush.bf16.msra.mxu0 %v215
    %368 = vmatpush.bf16.msra.mxu0 %v211
    %369 = vmatpush.bf16.msra.mxu0 %v207
    %370 = vmatpush.bf16.msra.mxu0 %v203
    %371 = vmatpush.bf16.msra.mxu0 %v199
    %372 = vmatpush.bf16.msra.mxu0 %v195
    %373 = vmatpush.bf16.msra.mxu0 %v191
    %374 = vmatpush.bf16.msra.mxu0 %v187
    %375 = vmatmul.bf16.gmra.mxu0 %v327
    %v376 = vpop.f32.mrf.mxu0
    %v377 = vadd.f32 0.0, %v376
    %v378 = vpop.f32.mrf.mxu0
    %379 = vdwg.mxu0
    %v380 = vadd.f32 %v323, %v338
    %v381 = vadd.f32 %v324, %v351
    %v382 = vadd.f32 %v325, %v364
    %v383 = vadd.f32 %v326, %v377
    %v384 = vmul.f32 %v380, 0.5
    %v385 = vtanh.pop %v384
    %v386 = vmul.f32 %v385, 0.5
    %v387 = vadd.f32 %v386, 0.5
    %v388 = vmul.f32 %v381, 0.5
    %v389 = vtanh.pop %v388
    %v390 = vmul.f32 %v389, 0.5
    %v391 = vadd.f32 %v390, 0.5
    %v392 = vtanh.pop %v382
    %v393 = vmul.f32 %v383, 0.5
    %v394 = vtanh.pop %v393
    %v395 = vmul.f32 %v394, 0.5
    %v396 = vadd.f32 %v395, 0.5
    %v397 = vmul.f32 %v391, %v319
    %v398 = vmul.f32 %v387, %v392
    %v399 = vadd.f32 %v397, %v398
    %v400 = vtanh.pop %v399
    %v401 = vmul.f32 %v396, %v400
    %s402 = scalar_lea.vmem [#allocation3], 64
    %v403 = vld [vmem:[%s402] sm:$0xff]
    %v404 = vld [vmem:[%s402 + $0x8] sm:$0xff]
    %v405 = vld [vmem:[%s402 + $0x10] sm:$0xff]
    %v406 = vld [vmem:[%s402 + $0x18] sm:$0xff]
    %v407 = vpack.c.bf16 %v401, %v401
    %408 = vmatpush.bf16.msra.mxu0 %v212
    %409 = vmatpush.bf16.msra.mxu0 %v208
    %410 = vmatpush.bf16.msra.mxu0 %v204
    %411 = vmatpush.bf16.msra.mxu0 %v200
    %412 = vmatpush.bf16.msra.mxu0 %v196
    %413 = vmatpush.bf16.msra.mxu0 %v192
    %414 = vmatpush.bf16.msra.mxu0 %v188
    %415 = vmatpush.bf16.msra.mxu0 %v184
    %416 = vmatmul.bf16.gmra.mxu0 %v407
    %v417 = vpop.f32.mrf.mxu0
    %v418 = vadd.f32 0.0, %v417
    %v419 = vpop.f32.mrf.mxu0
    %420 = vdwg.mxu0
    %421 = vmatpush.bf16.msra.mxu0 %v213
    %422 = vmatpush.bf16.msra.mxu0 %v209
    %423 = vmatpush.bf16.msra.mxu0 %v205
    %424 = vmatpush.bf16.msra.mxu0 %v201
    %425 = vmatpush.bf16.msra.mxu0 %v197
    %426 = vmatpush.bf16.msra.mxu0 %v193
    %427 = vmatpush.bf16.msra.mxu0 %v189
    %428 = vmatpush.bf16.msra.mxu0 %v185
    %429 = vmatmul.bf16.gmra.mxu0 %v407
    %v430 = vpop.f32.mrf.mxu0
    %v431 = vadd.f32 0.0, %v430
    %v432 = vpop.f32.mrf.mxu0
    %433 = vdwg.mxu0
    %434 = vmatpush.bf16.msra.mxu0 %v214
    %435 = vmatpush.bf16.msra.mxu0 %v210
    %436 = vmatpush.bf16.msra.mxu0 %v206
    %437 = vmatpush.bf16.msra.mxu0 %v202
    %438 = vmatpush.bf16.msra.mxu0 %v198
    %439 = vmatpush.bf16.msra.mxu0 %v194
    %440 = vmatpush.bf16.msra.mxu0 %v190
    %441 = vmatpush.bf16.msra.mxu0 %v186
    %442 = vmatmul.bf16.gmra.mxu0 %v407
    %v443 = vpop.f32.mrf.mxu0
    %v444 = vadd.f32 0.0, %v443
    %v445 = vpop.f32.mrf.mxu0
    %446 = vdwg.mxu0
    %447 = vmatpush.bf16.msra.mxu0 %v215
    %448 = vmatpush.bf16.msra.mxu0 %v211
    %449 = vmatpush.bf16.msra.mxu0 %v207
    %450 = vmatpush.bf16.msra.mxu0 %v203
    %451 = vmatpush.bf16.msra.mxu0 %v199
    %452 = vmatpush.bf16.msra.mxu0 %v195
    %453 = vmatpush.bf16.msra.mxu0 %v191
    %454 = vmatpush.bf16.msra.mxu0 %v187
    %455 = vmatmul.bf16.gmra.mxu0 %v407
    %v456 = vpop.f32.mrf.mxu0
    %v457 = vadd.f32 0.0, %v456
    %v458 = vpop.f32.mrf.mxu0
    %459 = vdwg.mxu0
    %v460 = vadd.f32 %v403, %v418
    %v461 = vadd.f32 %v404, %v431
    %v462 = vadd.f32 %v405, %v444
    %v463 = vadd.f32 %v406, %v457
    %v464 = vmul.f32 %v460, 0.5
    %v465 = vtanh.pop %v464
    %v466 = vmul.f32 %v465, 0.5
    %v467 = vadd.f32 %v466, 0.5
    %v468 = vmul.f32 %v461, 0.5
    %v469 = vtanh.pop %v468
    %v470 = vmul.f32 %v469, 0.5
    %v471 = vadd.f32 %v470, 0.5
    %v472 = vtanh.pop %v462
    %v473 = vmul.f32 %v463, 0.5
    %v474 = vtanh.pop %v473
    %v475 = vmul.f32 %v474, 0.5
    %v476 = vadd.f32 %v475, 0.5
    %v477 = vmul.f32 %v471, %v399
    %v478 = vmul.f32 %v467, %v472
    %v479 = vadd.f32 %v477, %v478
    %v480 = vtanh.pop %v479
    %v481 = vmul.f32 %v476, %v480
    %s482 = scalar_lea.vmem [#allocation3], 96
    %v483 = vld [vmem:[%s482] sm:$0xff]
    %v484 = vld [vmem:[%s482 + $0x8] sm:$0xff]
    %v485 = vld [vmem:[%s482 + $0x10] sm:$0xff]
    %v486 = vld [vmem:[%s482 + $0x18] sm:$0xff]
    %v487 = vpack.c.bf16 %v481, %v481
    %488 = vmatpush.bf16.msra.mxu0 %v212
    %489 = vmatpush.bf16.msra.mxu0 %v208
    %490 = vmatpush.bf16.msra.mxu0 %v204
    %491 = vmatpush.bf16.msra.mxu0 %v200
    %492 = vmatpush.bf16.msra.mxu0 %v196
    %493 = vmatpush.bf16.msra.mxu0 %v192
    %494 = vmatpush.bf16.msra.mxu0 %v188
    %495 = vmatpush.bf16.msra.mxu0 %v184
    %496 = vmatmul.bf16.gmra.mxu0 %v487
    %v497 = vpop.f32.mrf.mxu0
    %v498 = vadd.f32 0.0, %v497
    %v499 = vpop.f32.mrf.mxu0
    %500 = vdwg.mxu0
    %501 = vmatpush.bf16.msra.mxu0 %v213
    %502 = vmatpush.bf16.msra.mxu0 %v209
    %503 = vmatpush.bf16.msra.mxu0 %v205
    %504 = vmatpush.bf16.msra.mxu0 %v201
    %505 = vmatpush.bf16.msra.mxu0 %v197
    %506 = vmatpush.bf16.msra.mxu0 %v193
    %507 = vmatpush.bf16.msra.mxu0 %v189
    %508 = vmatpush.bf16.msra.mxu0 %v185
    %509 = vmatmul.bf16.gmra.mxu0 %v487
    %v510 = vpop.f32.mrf.mxu0
    %v511 = vadd.f32 0.0, %v510
    %v512 = vpop.f32.mrf.mxu0
    %513 = vdwg.mxu0
    %514 = vmatpush.bf16.msra.mxu0 %v214
    %515 = vmatpush.bf16.msra.mxu0 %v210
    %516 = vmatpush.bf16.msra.mxu0 %v206
    %517 = vmatpush.bf16.msra.mxu0 %v202
    %518 = vmatpush.bf16.msra.mxu0 %v198
    %519 = vmatpush.bf16.msra.mxu0 %v194
    %520 = vmatpush.bf16.msra.mxu0 %v190
    %521 = vmatpush.bf16.msra.mxu0 %v186
    %522 = vmatmul.bf16.gmra.mxu0 %v487
    %v523 = vpop.f32.mrf.mxu0
    %v524 = vadd.f32 0.0, %v523
    %v525 = vpop.f32.mrf.mxu0
    %526 = vdwg.mxu0
    %527 = vmatpush.bf16.msra.mxu0 %v215
    %528 = vmatpush.bf16.msra.mxu0 %v211
    %529 = vmatpush.bf16.msra.mxu0 %v207
    %530 = vmatpush.bf16.msra.mxu0 %v203
    %531 = vmatpush.bf16.msra.mxu0 %v199
    %532 = vmatpush.bf16.msra.mxu0 %v195
    %533 = vmatpush.bf16.msra.mxu0 %v191
    %534 = vmatpush.bf16.msra.mxu0 %v187
    %535 = vmatmul.bf16.gmra.mxu0 %v487
    %v536 = vpop.f32.mrf.mxu0
    %v537 = vadd.f32 0.0, %v536
    %v538 = vpop.f32.mrf.mxu0
    %539 = vdwg.mxu0
    %v540 = vadd.f32 %v483, %v498
    %v541 = vadd.f32 %v484, %v511
    %v542 = vadd.f32 %v485, %v524
    %v543 = vadd.f32 %v486, %v537
    %v544 = vmul.f32 %v540, 0.5
    %v545 = vtanh.pop %v544
    %v546 = vmul.f32 %v545, 0.5
    %v547 = vadd.f32 %v546, 0.5
    %v548 = vmul.f32 %v541, 0.5
    %v549 = vtanh.pop %v548
    %v550 = vmul.f32 %v549, 0.5
    %v551 = vadd.f32 %v550, 0.5
    %v552 = vtanh.pop %v542
    %v553 = vmul.f32 %v543, 0.5
    %v554 = vtanh.pop %v553
    %v555 = vmul.f32 %v554, 0.5
    %v556 = vadd.f32 %v555, 0.5
    %v557 = vmul.f32 %v551, %v479
    %v558 = vmul.f32 %v547, %v552
    %v559 = vadd.f32 %v557, %v558
    %v560 = vtanh.pop %v559
    %v561 = vmul.f32 %v556, %v560
    %s562 = scalar_lea.vmem [#allocation3], 128
    %v563 = vld [vmem:[%s562] sm:$0xff]
    %v564 = vld [vmem:[%s562 + $0x8] sm:$0xff]
    %v565 = vld [vmem:[%s562 + $0x10] sm:$0xff]
    %v566 = vld [vmem:[%s562 + $0x18] sm:$0xff]
    %v567 = vpack.c.bf16 %v561, %v561
    %568 = vmatpush.bf16.msra.mxu0 %v212
    %569 = vmatpush.bf16.msra.mxu0 %v208
    %570 = vmatpush.bf16.msra.mxu0 %v204
    %571 = vmatpush.bf16.msra.mxu0 %v200
    %572 = vmatpush.bf16.msra.mxu0 %v196
    %573 = vmatpush.bf16.msra.mxu0 %v192
    %574 = vmatpush.bf16.msra.mxu0 %v188
    %575 = vmatpush.bf16.msra.mxu0 %v184
    %576 = vmatmul.bf16.gmra.mxu0 %v567
    %v577 = vpop.f32.mrf.mxu0
    %v578 = vadd.f32 0.0, %v577
    %v579 = vpop.f32.mrf.mxu0
    %580 = vdwg.mxu0
    %581 = vmatpush.bf16.msra.mxu0 %v213
    %582 = vmatpush.bf16.msra.mxu0 %v209
    %583 = vmatpush.bf16.msra.mxu0 %v205
    %584 = vmatpush.bf16.msra.mxu0 %v201
    %585 = vmatpush.bf16.msra.mxu0 %v197
    %586 = vmatpush.bf16.msra.mxu0 %v193
    %587 = vmatpush.bf16.msra.mxu0 %v189
    %588 = vmatpush.bf16.msra.mxu0 %v185
    %589 = vmatmul.bf16.gmra.mxu0 %v567
    %v590 = vpop.f32.mrf.mxu0
    %v591 = vadd.f32 0.0, %v590
    %v592 = vpop.f32.mrf.mxu0
    %593 = vdwg.mxu0
    %594 = vmatpush.bf16.msra.mxu0 %v214
    %595 = vmatpush.bf16.msra.mxu0 %v210
    %596 = vmatpush.bf16.msra.mxu0 %v206
    %597 = vmatpush.bf16.msra.mxu0 %v202
    %598 = vmatpush.bf16.msra.mxu0 %v198
    %599 = vmatpush.bf16.msra.mxu0 %v194
    %600 = vmatpush.bf16.msra.mxu0 %v190
    %601 = vmatpush.bf16.msra.mxu0 %v186
    %602 = vmatmul.bf16.gmra.mxu0 %v567
    %v603 = vpop.f32.mrf.mxu0
    %v604 = vadd.f32 0.0, %v603
    %v605 = vpop.f32.mrf.mxu0
    %606 = vdwg.mxu0
    %607 = vmatpush.bf16.msra.mxu0 %v215
    %608 = vmatpush.bf16.msra.mxu0 %v211
    %609 = vmatpush.bf16.msra.mxu0 %v207
    %610 = vmatpush.bf16.msra.mxu0 %v203
    %611 = vmatpush.bf16.msra.mxu0 %v199
    %612 = vmatpush.bf16.msra.mxu0 %v195
    %613 = vmatpush.bf16.msra.mxu0 %v191
    %614 = vmatpush.bf16.msra.mxu0 %v187
    %615 = vmatmul.bf16.gmra.mxu0 %v567
    %v616 = vpop.f32.mrf.mxu0
    %v617 = vadd.f32 0.0, %v616
    %v618 = vpop.f32.mrf.mxu0
    %619 = vdwg.mxu0
    %v620 = vadd.f32 %v563, %v578
    %v621 = vadd.f32 %v564, %v591
    %v622 = vadd.f32 %v565, %v604
    %v623 = vadd.f32 %v566, %v617
    %v624 = vmul.f32 %v620, 0.5
    %v625 = vtanh.pop %v624
    %v626 = vmul.f32 %v625, 0.5
    %v627 = vadd.f32 %v626, 0.5
    %v628 = vmul.f32 %v621, 0.5
    %v629 = vtanh.pop %v628
    %v630 = vmul.f32 %v629, 0.5
    %v631 = vadd.f32 %v630, 0.5
    %v632 = vtanh.pop %v622
    %v633 = vmul.f32 %v623, 0.5
    %v634 = vtanh.pop %v633
    %v635 = vmul.f32 %v634, 0.5
    %v636 = vadd.f32 %v635, 0.5
    %v637 = vmul.f32 %v631, %v559
    %v638 = vmul.f32 %v627, %v632
    %v639 = vadd.f32 %v637, %v638
    %v640 = vtanh.pop %v639
    %v641 = vmul.f32 %v636, %v640
    %s642 = scalar_lea.vmem [#allocation3], 160
    %v643 = vld [vmem:[%s642] sm:$0xff]
    %v644 = vld [vmem:[%s642 + $0x8] sm:$0xff]
    %v645 = vld [vmem:[%s642 + $0x10] sm:$0xff]
    %v646 = vld [vmem:[%s642 + $0x18] sm:$0xff]
    %v647 = vpack.c.bf16 %v641, %v641
    %648 = vmatpush.bf16.msra.mxu0 %v212
    %649 = vmatpush.bf16.msra.mxu0 %v208
    %650 = vmatpush.bf16.msra.mxu0 %v204
    %651 = vmatpush.bf16.msra.mxu0 %v200
    %652 = vmatpush.bf16.msra.mxu0 %v196
    %653 = vmatpush.bf16.msra.mxu0 %v192
    %654 = vmatpush.bf16.msra.mxu0 %v188
    %655 = vmatpush.bf16.msra.mxu0 %v184
    %656 = vmatmul.bf16.gmra.mxu0 %v647
    %v657 = vpop.f32.mrf.mxu0
    %v658 = vadd.f32 0.0, %v657
    %v659 = vpop.f32.mrf.mxu0
    %660 = vdwg.mxu0
    %661 = vmatpush.bf16.msra.mxu0 %v213
    %662 = vmatpush.bf16.msra.mxu0 %v209
    %663 = vmatpush.bf16.msra.mxu0 %v205
    %664 = vmatpush.bf16.msra.mxu0 %v201
    %665 = vmatpush.bf16.msra.mxu0 %v197
    %666 = vmatpush.bf16.msra.mxu0 %v193
    %667 = vmatpush.bf16.msra.mxu0 %v189
    %668 = vmatpush.bf16.msra.mxu0 %v185
    %669 = vmatmul.bf16.gmra.mxu0 %v647
    %v670 = vpop.f32.mrf.mxu0
    %v671 = vadd.f32 0.0, %v670
    %v672 = vpop.f32.mrf.mxu0
    %673 = vdwg.mxu0
    %674 = vmatpush.bf16.msra.mxu0 %v214
    %675 = vmatpush.bf16.msra.mxu0 %v210
    %676 = vmatpush.bf16.msra.mxu0 %v206
    %677 = vmatpush.bf16.msra.mxu0 %v202
    %678 = vmatpush.bf16.msra.mxu0 %v198
    %679 = vmatpush.bf16.msra.mxu0 %v194
    %680 = vmatpush.bf16.msra.mxu0 %v190
    %681 = vmatpush.bf16.msra.mxu0 %v186
    %682 = vmatmul.bf16.gmra.mxu0 %v647
    %v683 = vpop.f32.mrf.mxu0
    %v684 = vadd.f32 0.0, %v683
    %v685 = vpop.f32.mrf.mxu0
    %686 = vdwg.mxu0
    %687 = vmatpush.bf16.msra.mxu0 %v215
    %688 = vmatpush.bf16.msra.mxu0 %v211
    %689 = vmatpush.bf16.msra.mxu0 %v207
    %690 = vmatpush.bf16.msra.mxu0 %v203
    %691 = vmatpush.bf16.msra.mxu0 %v199
    %692 = vmatpush.bf16.msra.mxu0 %v195
    %693 = vmatpush.bf16.msra.mxu0 %v191
    %694 = vmatpush.bf16.msra.mxu0 %v187
    %695 = vmatmul.bf16.gmra.mxu0 %v647
    %v696 = vpop.f32.mrf.mxu0
    %v697 = vadd.f32 0.0, %v696
    %v698 = vpop.f32.mrf.mxu0
    %699 = vdwg.mxu0
    %v700 = vadd.f32 %v643, %v658
    %v701 = vadd.f32 %v644, %v671
    %v702 = vadd.f32 %v645, %v684
    %v703 = vadd.f32 %v646, %v697
    %v704 = vmul.f32 %v700, 0.5
    %v705 = vtanh.pop %v704
    %v706 = vmul.f32 %v705, 0.5
    %v707 = vadd.f32 %v706, 0.5
    %v708 = vmul.f32 %v701, 0.5
    %v709 = vtanh.pop %v708
    %v710 = vmul.f32 %v709, 0.5
    %v711 = vadd.f32 %v710, 0.5
    %v712 = vtanh.pop %v702
    %v713 = vmul.f32 %v703, 0.5
    %v714 = vtanh.pop %v713
    %v715 = vmul.f32 %v714, 0.5
    %v716 = vadd.f32 %v715, 0.5
    %v717 = vmul.f32 %v711, %v639
    %v718 = vmul.f32 %v707, %v712
    %v719 = vadd.f32 %v717, %v718
    %v720 = vtanh.pop %v719
    %v721 = vmul.f32 %v716, %v720
    %s722 = scalar_lea.vmem [#allocation3], 192
    %v723 = vld [vmem:[%s722] sm:$0xff]
    %v724 = vld [vmem:[%s722 + $0x8] sm:$0xff]
    %v725 = vld [vmem:[%s722 + $0x10] sm:$0xff]
    %v726 = vld [vmem:[%s722 + $0x18] sm:$0xff]
    %v727 = vpack.c.bf16 %v721, %v721
    %728 = vmatpush.bf16.msra.mxu0 %v212
    %729 = vmatpush.bf16.msra.mxu0 %v208
    %730 = vmatpush.bf16.msra.mxu0 %v204
    %731 = vmatpush.bf16.msra.mxu0 %v200
    %732 = vmatpush.bf16.msra.mxu0 %v196
    %733 = vmatpush.bf16.msra.mxu0 %v192
    %734 = vmatpush.bf16.msra.mxu0 %v188
    %735 = vmatpush.bf16.msra.mxu0 %v184
    %736 = vmatmul.bf16.gmra.mxu0 %v727
    %v737 = vpop.f32.mrf.mxu0
    %v738 = vadd.f32 0.0, %v737
    %v739 = vpop.f32.mrf.mxu0
    %740 = vdwg.mxu0
    %741 = vmatpush.bf16.msra.mxu0 %v213
    %742 = vmatpush.bf16.msra.mxu0 %v209
    %743 = vmatpush.bf16.msra.mxu0 %v205
    %744 = vmatpush.bf16.msra.mxu0 %v201
    %745 = vmatpush.bf16.msra.mxu0 %v197
    %746 = vmatpush.bf16.msra.mxu0 %v193
    %747 = vmatpush.bf16.msra.mxu0 %v189
    %748 = vmatpush.bf16.msra.mxu0 %v185
    %749 = vmatmul.bf16.gmra.mxu0 %v727
    %v750 = vpop.f32.mrf.mxu0
    %v751 = vadd.f32 0.0, %v750
    %v752 = vpop.f32.mrf.mxu0
    %753 = vdwg.mxu0
    %754 = vmatpush.bf16.msra.mxu0 %v214
    %755 = vmatpush.bf16.msra.mxu0 %v210
    %756 = vmatpush.bf16.msra.mxu0 %v206
    %757 = vmatpush.bf16.msra.mxu0 %v202
    %758 = vmatpush.bf16.msra.mxu0 %v198
    %759 = vmatpush.bf16.msra.mxu0 %v194
    %760 = vmatpush.bf16.msra.mxu0 %v190
    %761 = vmatpush.bf16.msra.mxu0 %v186
    %762 = vmatmul.bf16.gmra.mxu0 %v727
    %v763 = vpop.f32.mrf.mxu0
    %v764 = vadd.f32 0.0, %v763
    %v765 = vpop.f32.mrf.mxu0
    %766 = vdwg.mxu0
    %767 = vmatpush.bf16.msra.mxu0 %v215
    %768 = vmatpush.bf16.msra.mxu0 %v211
    %769 = vmatpush.bf16.msra.mxu0 %v207
    %770 = vmatpush.bf16.msra.mxu0 %v203
    %771 = vmatpush.bf16.msra.mxu0 %v199
    %772 = vmatpush.bf16.msra.mxu0 %v195
    %773 = vmatpush.bf16.msra.mxu0 %v191
    %774 = vmatpush.bf16.msra.mxu0 %v187
    %775 = vmatmul.bf16.gmra.mxu0 %v727
    %v776 = vpop.f32.mrf.mxu0
    %v777 = vadd.f32 0.0, %v776
    %v778 = vpop.f32.mrf.mxu0
    %779 = vdwg.mxu0
    %v780 = vadd.f32 %v723, %v738
    %v781 = vadd.f32 %v724, %v751
    %v782 = vadd.f32 %v725, %v764
    %v783 = vadd.f32 %v726, %v777
    %v784 = vmul.f32 %v780, 0.5
    %v785 = vtanh.pop %v784
    %v786 = vmul.f32 %v785, 0.5
    %v787 = vadd.f32 %v786, 0.5
    %v788 = vmul.f32 %v781, 0.5
    %v789 = vtanh.pop %v788
    %v790 = vmul.f32 %v789, 0.5
    %v791 = vadd.f32 %v790, 0.5
    %v792 = vtanh.pop %v782
    %v793 = vmul.f32 %v783, 0.5
    %v794 = vtanh.pop %v793
    %v795 = vmul.f32 %v794, 0.5
    %v796 = vadd.f32 %v795, 0.5
    %v797 = vmul.f32 %v791, %v719
    %v798 = vmul.f32 %v787, %v792
    %v799 = vadd.f32 %v797, %v798
    %v800 = vtanh.pop %v799
    %v801 = vmul.f32 %v796, %v800
    %s802 = scalar_lea.vmem [#allocation3], 224
    %v803 = vld [vmem:[%s802] sm:$0xff]
    %v804 = vld [vmem:[%s802 + $0x8] sm:$0xff]
    %v805 = vld [vmem:[%s802 + $0x10] sm:$0xff]
    %v806 = vld [vmem:[%s802 + $0x18] sm:$0xff]
    %v807 = vpack.c.bf16 %v801, %v801
    %808 = vmatpush.bf16.msra.mxu0 %v212
    %809 = vmatpush.bf16.msra.mxu0 %v208
    %810 = vmatpush.bf16.msra.mxu0 %v204
    %811 = vmatpush.bf16.msra.mxu0 %v200
    %812 = vmatpush.bf16.msra.mxu0 %v196
    %813 = vmatpush.bf16.msra.mxu0 %v192
    %814 = vmatpush.bf16.msra.mxu0 %v188
    %815 = vmatpush.bf16.msra.mxu0 %v184
    %816 = vmatmul.bf16.gmra.mxu0 %v807
    %v817 = vpop.f32.mrf.mxu0
    %v818 = vadd.f32 0.0, %v817
    %v819 = vpop.f32.mrf.mxu0
    %820 = vdwg.mxu0
    %821 = vmatpush.bf16.msra.mxu0 %v213
    %822 = vmatpush.bf16.msra.mxu0 %v209
    %823 = vmatpush.bf16.msra.mxu0 %v205
    %824 = vmatpush.bf16.msra.mxu0 %v201
    %825 = vmatpush.bf16.msra.mxu0 %v197
    %826 = vmatpush.bf16.msra.mxu0 %v193
    %827 = vmatpush.bf16.msra.mxu0 %v189
    %828 = vmatpush.bf16.msra.mxu0 %v185
    %829 = vmatmul.bf16.gmra.mxu0 %v807
    %v830 = vpop.f32.mrf.mxu0
    %v831 = vadd.f32 0.0, %v830
    %v832 = vpop.f32.mrf.mxu0
    %833 = vdwg.mxu0
    %834 = vmatpush.bf16.msra.mxu0 %v214
    %835 = vmatpush.bf16.msra.mxu0 %v210
    %836 = vmatpush.bf16.msra.mxu0 %v206
    %837 = vmatpush.bf16.msra.mxu0 %v202
    %838 = vmatpush.bf16.msra.mxu0 %v198
    %839 = vmatpush.bf16.msra.mxu0 %v194
    %840 = vmatpush.bf16.msra.mxu0 %v190
    %841 = vmatpush.bf16.msra.mxu0 %v186
    %842 = vmatmul.bf16.gmra.mxu0 %v807
    %v843 = vpop.f32.mrf.mxu0
    %v844 = vadd.f32 0.0, %v843
    %v845 = vpop.f32.mrf.mxu0
    %846 = vdwg.mxu0
    %847 = vmatpush.bf16.msra.mxu0 %v215
    %848 = vmatpush.bf16.msra.mxu0 %v211
    %849 = vmatpush.bf16.msra.mxu0 %v207
    %850 = vmatpush.bf16.msra.mxu0 %v203
    %851 = vmatpush.bf16.msra.mxu0 %v199
    %852 = vmatpush.bf16.msra.mxu0 %v195
    %853 = vmatpush.bf16.msra.mxu0 %v191
    %854 = vmatpush.bf16.msra.mxu0 %v187
    %855 = vmatmul.bf16.gmra.mxu0 %v807
    %v856 = vpop.f32.mrf.mxu0
    %v857 = vadd.f32 0.0, %v856
    %v858 = vpop.f32.mrf.mxu0
    %859 = vdwg.mxu0
    %v860 = vadd.f32 %v803, %v818
    %v861 = vadd.f32 %v804, %v831
    %v862 = vadd.f32 %v805, %v844
    %v863 = vadd.f32 %v806, %v857
    %v864 = vmul.f32 %v860, 0.5
    %v865 = vtanh.pop %v864
    %v866 = vmul.f32 %v865, 0.5
    %v867 = vadd.f32 %v866, 0.5
    %v868 = vmul.f32 %v861, 0.5
    %v869 = vtanh.pop %v868
    %v870 = vmul.f32 %v869, 0.5
    %v871 = vadd.f32 %v870, 0.5
    %v872 = vtanh.pop %v862
    %v873 = vmul.f32 %v863, 0.5
    %v874 = vtanh.pop %v873
    %v875 = vmul.f32 %v874, 0.5
    %v876 = vadd.f32 %v875, 0.5
    %v877 = vmul.f32 %v871, %v799
    %v878 = vmul.f32 %v867, %v872
    %v879 = vadd.f32 %v877, %v878
    %v880 = vtanh.pop %v879
    %v881 = vmul.f32 %v876, %v880
    %v882 = vld [vmem:[%s2] sm:$0x1]
    %v884 = vperm.slane %v882, 0
    %v886 = vmul.f32 %v881, %v884
    %887 = vadd.xlane.f32.xlu0 %v886
    %v888 = vpop.xlane.xlu0 %887
    %v889 = vld [vmem:[#allocation2] sm:$0x1]
    %v891 = vperm.slane %v889, 0
    %v893 = vadd.f32 %v888, %v891
    %vm894 = vcmask 7168
    %895 = vst.msk [vmem:[%s4] sm:$0xff] %vm894, %v893
    // Predicated region
    $region26: #{tpu_custom_call.1} parent=1 // pred_check
      _
    $region27: #{tpu_custom_call.1} parent=1 // pred_check_branch
      %897 = sbr.rel (0) target = $region29
    $region28: #{tpu_custom_call.1} parent=1 // pred_region
      _
    $region29: #{tpu_custom_call.1} parent=1 // pred_fallthru
      _
    // Predicated region
    $region30: #{tpu_custom_call.1} parent=1 // pred_check
      _
    $region31: #{tpu_custom_call.1} parent=1 // pred_check_branch
      %899 = sbr.rel (0) target = $region33
    $region32: #{tpu_custom_call.1} parent=1 // pred_region
      _
    $region33: #{tpu_custom_call.1} parent=1 // pred_fallthru
      _
    %900 = vsyncpa [#allocation4], 1
    %901 = vsyncpa [#allocation6], 1

</llo_original>
